<compile_context>
chip_gen: v7x
topology: tpu7x:2x2x1
jax: 0.10.0
libtpu: 0.0.40
codegen_flags: <defaults>
</compile_context>

<pallas_src>
import functools

import jax
import jax.numpy as jnp
import numpy as np
from jax.experimental import pallas as pl
from jax.experimental.pallas import tpu as pltpu

LANES = 128
SUBLANES = 8
TILE_ROWS = 8192                 # 8192*128*4B = 4 MiB / operand / buffer (f32)
VMEM_LIMIT_BYTES = 48 << 20      # < 64 MiB physical on v7x; plenty on v5e/v6e


def _cdiv(a, b):
    return -(-a // b)


def _num_tensorcores():
    """Best-effort TensorCores-per-device query (2 on megacore-style chips)."""
    try:
        kind = jax.devices()[0].device_kind.lower()
    except Exception:
        return 2
    single_core = ("v5 lite", "v5e", "v5litepod", "v6 lite", "v6e", "v2", "v3")
    if any(s in kind for s in single_core):
        return 1
    return 2  # v4 / v5p / v7x style: shard row-blocks across both TensorCores.


def _wing_loss_kernel(x_ref, t_ref, wt_ref, o_ref, *, w, inv_e, c,
                      inner_steps, full_steps, rem_rows,
                      weight_is_scalar, needs_mask):
    p = pl.program_id(0)   # split across TensorCores ("parallel")
    i = pl.program_id(1)   # sequential reduction over row-blocks ("arbitrary")

    # The (8,128) output block is resident across the inner axis and doubles
    # as the accumulator; zero it on each split's first visit.
    @pl.when(i == 0)
    def _():
        o_ref[...] = jnp.zeros_like(o_ref)

    x = x_ref[...].astype(jnp.float32)
    t = t_ref[...].astype(jnp.float32)
    if weight_is_scalar:
        wt = wt_ref[0]                          # f32 scalar from SMEM
    else:
        wt = wt_ref[...].astype(jnp.float32)

    diff = wt * (x - t)
    abs_diff = jnp.abs(diff)
    # Matches torch: flag*w*log(1+|d|/e) + (1-flag)*(|d|-C), flag = |d| < w.
    y = jnp.where(abs_diff < w, w * jnp.log(1.0 + abs_diff * inv_e), abs_diff - c)

    def accumulate(v):
        rows, lanes = v.shape
        if rows % SUBLANES == 0:
            # Pure VPU adds: collapse groups of 8 rows onto the resident
            # (8,128) block; cross-lane reduction is deferred to the wrapper.
            o_ref[...] += jnp.sum(v.reshape(rows // SUBLANES, SUBLANES, lanes), axis=0)
        else:
            # Tiny single-block case (full-array block, rows % 8 != 0).
            o_ref[0:1, :] += jnp.sum(v, axis=0, keepdims=True)

    if not needs_mask:
        accumulate(y)
    else:
        step = p * inner_steps + i

        @pl.when(step < full_steps)
        def _():
            # Fast path: full blocks pay zero mask cost.
            accumulate(y)

        @pl.when(step >= full_steps)
        def _():
            # Only the (row-aligned) partial last block and replayed clamped
            # blocks land here: one sublane iota + one compare per vreg.
            rows, lanes = y.shape
            row_ids = jax.lax.broadcasted_iota(jnp.int32, (rows, lanes), 0)
            valid_rows = jnp.where(step == full_steps, rem_rows, 0)
            accumulate(jnp.where(row_ids < valid_rows, y, 0.0))


def _prep(a):
    """Keep HBM traffic narrow; the kernel casts to f32 internally."""
    if a.dtype == jnp.bool_:
        return a.astype(jnp.int8)
    if jnp.issubdtype(a.dtype, jnp.floating):
        return a                                   # f32 / bf16 / f16 stay as-is
    if jnp.issubdtype(a.dtype, jnp.integer):
        return a if a.dtype.itemsize <= 4 else a.astype(jnp.int32)
    return a.astype(jnp.float32)


def wing_loss(x, t, weight, w=10.0, e=2.0, sigma=1.0, *,
              _tile_rows=None, _num_splits=None):
    """Pallas TPU implementation of WingLoss.forward (sigma unused, as in torch)."""
    del sigma  # unused in the reference forward as well
    c = float(w - w * np.log(1.0 + w / e))
    inv_e = float(1.0 / e)
    wf = float(w)

    x = jnp.asarray(x)
    t = jnp.asarray(t)
    weight = jnp.asarray(weight)

    shape = jnp.broadcast_shapes(x.shape, t.shape, weight.shape)
    n = int(np.prod(shape))
    if n == 0:
        return jnp.float32(0.0)

    weight_is_scalar = int(np.prod(weight.shape)) == 1
    x = jnp.broadcast_to(x, shape)
    t = jnp.broadcast_to(t, shape)
    if not weight_is_scalar:
        # TODO(synk): non-scalar low-rank broadcast weights could keep their
        # native size with a dedicated stride-0 BlockSpec instead of this copy.
        weight = jnp.broadcast_to(weight, shape)

    x, t = _prep(x), _prep(t)
    xf = x.reshape(-1)
    tf = t.reshape(-1)
    if weight_is_scalar:
        w_scalar = weight.reshape(()).astype(jnp.float32)
        wt_flat = None
    else:
        weight = _prep(weight)
        wt_flat = weight.reshape(-1)

    n_main = (n // LANES) * LANES
    tail = n - n_main

    def _plain_chunk(xa, ta, wa):
        xa = xa.astype(jnp.float32)
        ta = ta.astype(jnp.float32)
        wa = jnp.asarray(wa).astype(jnp.float32)
        d = wa * (xa - ta)
        ad = jnp.abs(d)
        return jnp.sum(jnp.where(ad < wf, wf * jnp.log(1.0 + ad * inv_e), ad - c))

    tail_sum = jnp.float32(0.0)
    if tail:
        wt_tail = w_scalar if weight_is_scalar else wt_flat[n_main:]
        tail_sum = _plain_chunk(xf[n_main:], tf[n_main:], wt_tail)

    if n_main == 0:
        # Fewer than 128 elements total: plain jnp is the right tool.
        return tail_sum

    m_rows = n_main // LANES

    def to_slab(flat):
        if tail:
            flat = flat[:n_main]
        return flat.reshape(m_rows, LANES)          # free reshape when tail == 0

    xs, ts = to_slab(xf), to_slab(tf)
    ws = w_scalar.reshape(1) if weight_is_scalar else to_slab(wt_flat)

    tile_rows = TILE_ROWS if _tile_rows is None else int(_tile_rows)
    tile_rows = min(tile_rows, m_rows)
    nrb = _cdiv(m_rows, tile_rows)                  # number of row-blocks
    if _num_splits is not None:
        num_splits = int(_num_splits)
    else:
        num_splits = 2 if (nrb >= 2 and _num_tensorcores() >= 2) else 1
    num_splits = max(1, min(num_splits, nrb))
    inner = _cdiv(nrb, num_splits)

    full_steps = m_rows // tile_rows                # blocks with no masking
    rem_rows = m_rows % tile_rows                   # valid rows of partial block
    needs_mask = (num_splits * inner * tile_rows) != m_rows

    kernel = functools.partial(
        _wing_loss_kernel, w=wf, inv_e=inv_e, c=c,
        inner_steps=inner, full_steps=full_steps, rem_rows=rem_rows,
        weight_is_scalar=weight_is_scalar, needs_mask=needs_mask)

    def in_map(p, i):
        # Clamp replayed steps into range; their contribution is masked to 0.
        return (jnp.minimum(p * inner + i, nrb - 1), 0)

    slab_spec = pl.BlockSpec((tile_rows, LANES), in_map)
    if weight_is_scalar:
        w_spec = pl.BlockSpec(memory_space=pltpu.MemorySpace.SMEM)
    else:
        w_spec = slab_spec

    bytes_accessed = (xs.size * xs.dtype.itemsize + ts.size * ts.dtype.itemsize
                      + ws.size * ws.dtype.itemsize
                      + num_splits * SUBLANES * LANES * 4)
    cost = pl.CostEstimate(flops=7 * n_main, transcendentals=n_main,
                           bytes_accessed=int(bytes_accessed))

    partials = pl.pallas_call(
        kernel,
        out_shape=jax.ShapeDtypeStruct((num_splits * SUBLANES, LANES), jnp.float32),
        grid_spec=pltpu.PrefetchScalarGridSpec(
            num_scalar_prefetch=0,
            grid=(num_splits, inner),
            in_specs=[slab_spec, slab_spec, w_spec],
            out_specs=pl.BlockSpec((SUBLANES, LANES), lambda p, i: (p, 0)),
        ),
        compiler_params=pltpu.CompilerParams(
            dimension_semantics=("parallel", "arbitrary"),
            vmem_limit_bytes=VMEM_LIMIT_BYTES),
        cost_estimate=cost,
    )(xs, ts, ws)

    # One cheap final reduce of the per-core (8,128) partial sums + jnp tail.
    return jnp.sum(partials) + tail_sum


def wing_loss_ref(x, t, weight, w=10.0, e=2.0):
    c = w - w * np.log(1.0 + w / e)
    x = jnp.asarray(x).astype(jnp.float32)
    t = jnp.asarray(t).astype(jnp.float32)
    weight = jnp.asarray(weight).astype(jnp.float32)
    diff = weight * (x - t)
    abs_diff = jnp.abs(diff)
    flag = (abs_diff < w).astype(jnp.float32)
    y = flag * w * jnp.log(1.0 + abs_diff / e) + (1.0 - flag) * (abs_diff - c)
    return jnp.sum(y)


def _check(out, ref):
    out = np.asarray(jax.block_until_ready(out))
    ref = np.asarray(ref)
    assert np.allclose(out, ref, rtol=1e-5, atol=1e-3), (out, ref)


if __name__ == "__main__":
    key = jax.random.PRNGKey(0)
    k1, k2, k3 = jax.random.split(key, 3)

    # 1) Spec-consistent small NCHW inputs with a per-element weight mask.
    shape = (2, 4, 16, 16)
    x = jax.random.normal(k1, shape, jnp.float32) * 5.0
    t = jax.random.normal(k2, shape, jnp.float32) * 5.0
    weight = (jax.random.uniform(k3, shape, jnp.float32) > 0.3).astype(jnp.float32)
    _check(wing_loss(x, t, weight), wing_loss_ref(x, t, weight))

    # 2) Scalar weight -> SMEM path, no broadcast materialized in HBM.
    _check(wing_loss(x, t, jnp.float32(0.7)), wing_loss_ref(x, t, jnp.float32(0.7)))

    # 3) Boolean mask weight streamed as int8 (narrow-dtype path).
    shape3 = (8, 512)
    x3 = jax.random.normal(k1, shape3, jnp.float32) * 8.0
    t3 = jax.random.normal(k2, shape3, jnp.float32) * 8.0
    w3 = jax.random.uniform(k3, shape3, jnp.float32) > 0.5        # bool
    _check(wing_loss(x3, t3, w3), wing_loss_ref(x3, t3, w3))

    # 4) Unaligned numel: sub-128 tail handled with plain jnp in the wrapper.
    shape4 = (3, 171)
    x4 = jax.random.normal(k1, shape4, jnp.float32) * 5.0
    t4 = jax.random.normal(k2, shape4, jnp.float32) * 5.0
    w4 = jax.random.uniform(k3, shape4, jnp.float32)
    _check(wing_loss(x4, t4, w4), wing_loss_ref(x4, t4, w4))

    # 5) Forced multi-block + 2-way split: exercises the partial-last-block and
    #    replayed-block mask path that large inputs hit in production.
    shape5 = (4, 5, 128)
    x5 = jax.random.normal(k1, shape5, jnp.float32) * 6.0
    t5 = jax.random.normal(k2, shape5, jnp.float32) * 6.0
    w5 = jax.random.uniform(k3, shape5, jnp.float32)
    _check(wing_loss(x5, t5, w5, _tile_rows=8, _num_splits=2),
           wing_loss_ref(x5, t5, w5))

    print("KERNEL_OK")
</pallas_src>

<mosaic_0001>
module attributes {stable_mosaic.version = 11 : i64} {
  func.func @_wing_loss_kernel(%arg0: i32, %arg1: i32, %arg2: memref<16x128xf32, #tpu.memory_space<vmem>>, %arg3: memref<16x128xf32, #tpu.memory_space<vmem>>, %arg4: memref<16x128xf32, #tpu.memory_space<vmem>>, %arg5: memref<8x128xf32, #tpu.memory_space<vmem>>) attributes {dimension_semantics = [#tpu.dimension_semantics<parallel>, #tpu.dimension_semantics<arbitrary>], iteration_bounds = array<i64: 1, 1>, scalar_prefetch = 0 : i64, scratch_operands = 0 : i64, tpu.core_type = #tpu.core_type<tc>, window_params = [{transform_indices = @transform_0, window_bounds = array<i64: 16, 128>}, {transform_indices = @transform_1, window_bounds = array<i64: 16, 128>}, {transform_indices = @transform_2, window_bounds = array<i64: 16, 128>}, {transform_indices = @transform_3, window_bounds = array<i64: 8, 128>}]} {
    %c0_i32 = arith.constant 0 : i32
    %0 = arith.cmpi eq, %arg1, %c0_i32 : i32
    %1 = arith.extui %0 : i1 to i32
    %c0_i32_0 = arith.constant 0 : i32
    %2 = arith.cmpi ne, %1, %c0_i32_0 : i32
    scf.if %2 {
      %cst_15 = arith.constant 0.000000e+00 : f32
      %26 = vector.broadcast %cst_15 : f32 to vector<8x128xf32>
      %c0_16 = arith.constant 0 : index
      %c0_17 = arith.constant 0 : index
      %27 = vector.load %arg5[%c0_16, %c0_17] : memref<8x128xf32, #tpu.memory_space<vmem>>, vector<8x128xf32>
      tpu.vector_store %arg5[%c0_16, %c0_17], %26 {strides = array<i32>} : memref<8x128xf32, #tpu.memory_space<vmem>>, vector<8x128xf32>,
    } else {
    }
    %c0 = arith.constant 0 : index
    %c0_1 = arith.constant 0 : index
    %3 = vector.load %arg2[%c0, %c0_1] : memref<16x128xf32, #tpu.memory_space<vmem>>, vector<16x128xf32>
    %c0_2 = arith.constant 0 : index
    %c0_3 = arith.constant 0 : index
    %4 = vector.load %arg3[%c0_2, %c0_3] : memref<16x128xf32, #tpu.memory_space<vmem>>, vector<16x128xf32>
    %c0_4 = arith.constant 0 : index
    %c0_5 = arith.constant 0 : index
    %5 = vector.load %arg4[%c0_4, %c0_5] : memref<16x128xf32, #tpu.memory_space<vmem>>, vector<16x128xf32>
    %6 = arith.subf %3, %4 : vector<16x128xf32>
    %7 = arith.mulf %5, %6 : vector<16x128xf32>
    %8 = math.absf %7 : vector<16x128xf32>
    %cst = arith.constant 1.000000e+01 : f32
    %9 = vector.broadcast %cst : f32 to vector<16x128xf32>
    %10 = arith.cmpf olt, %8, %9 : vector<16x128xf32>
    %cst_6 = arith.constant 5.000000e-01 : f32
    %11 = vector.broadcast %cst_6 : f32 to vector<16x128xf32>
    %12 = arith.mulf %8, %11 : vector<16x128xf32>
    %cst_7 = arith.constant 1.000000e+00 : f32
    %13 = vector.broadcast %cst_7 : f32 to vector<16x128xf32>
    %14 = arith.addf %13, %12 : vector<16x128xf32>
    %15 = math.log %14 : vector<16x128xf32>
    %cst_8 = arith.constant 1.000000e+01 : f32
    %16 = vector.broadcast %cst_8 : f32 to vector<16x128xf32>
    %17 = arith.mulf %16, %15 : vector<16x128xf32>
    %cst_9 = arith.constant -7.9175949 : f32
    %18 = vector.broadcast %cst_9 : f32 to vector<16x128xf32>
    %19 = arith.subf %8, %18 : vector<16x128xf32>
    %20 = arith.select %10, %17, %19 : vector<16x128xi1>, vector<16x128xf32>
    %c0_10 = arith.constant 0 : index
    %c0_11 = arith.constant 0 : index
    %21 = vector.load %arg5[%c0_10, %c0_11] : memref<8x128xf32, #tpu.memory_space<vmem>>, vector<8x128xf32>
    %22 = vector.shape_cast %20 : vector<16x128xf32> to vector<2x8x128xf32>
    %cst_12 = arith.constant dense<0.000000e+00> : vector<8x128xf32>
    %23 = vector.multi_reduction <add>, %22, %cst_12 [0] : vector<2x8x128xf32> to vector<8x128xf32>
    %24 = arith.addf %21, %23 : vector<8x128xf32>
    %c0_13 = arith.constant 0 : index
    %c0_14 = arith.constant 0 : index
    %25 = vector.load %arg5[%c0_13, %c0_14] : memref<8x128xf32, #tpu.memory_space<vmem>>, vector<8x128xf32>
    tpu.vector_store %arg5[%c0_13, %c0_14], %24 {strides = array<i32>} : memref<8x128xf32, #tpu.memory_space<vmem>>, vector<8x128xf32>,
    return
  }
  func.func @transform_0(%arg0: i32, %arg1: i32) -> (i32, i32) {
    %c1_i32 = arith.constant 1 : i32
    %0 = arith.muli %arg0, %c1_i32 : i32
    %1 = arith.addi %0, %arg1 : i32
    %c0_i32 = arith.constant 0 : i32
    %2 = arith.minsi %1, %c0_i32 : i32
    %c0_i32_0 = arith.constant 0 : i32
    %c0_i32_1 = arith.constant 0 : i32
    return %2, %c0_i32_0 : i32, i32
  }
  func.func @transform_1(%arg0: i32, %arg1: i32) -> (i32, i32) {
    %c1_i32 = arith.constant 1 : i32
    %0 = arith.muli %arg0, %c1_i32 : i32
    %1 = arith.addi %0, %arg1 : i32
    %c0_i32 = arith.constant 0 : i32
    %2 = arith.minsi %1, %c0_i32 : i32
    %c0_i32_0 = arith.constant 0 : i32
    %c0_i32_1 = arith.constant 0 : i32
    return %2, %c0_i32_0 : i32, i32
  }
  func.func @transform_2(%arg0: i32, %arg1: i32) -> (i32, i32) {
    %c1_i32 = arith.constant 1 : i32
    %0 = arith.muli %arg0, %c1_i32 : i32
    %1 = arith.addi %0, %arg1 : i32
    %c0_i32 = arith.constant 0 : i32
    %2 = arith.minsi %1, %c0_i32 : i32
    %c0_i32_0 = arith.constant 0 : i32
    %c0_i32_1 = arith.constant 0 : i32
    return %2, %c0_i32_0 : i32, i32
  }
  func.func @transform_3(%arg0: i32, %arg1: i32) -> (i32, i32) {
    %c0_i32 = arith.constant 0 : i32
    %c0_i32_0 = arith.constant 0 : i32
    return %arg0, %c0_i32 : i32, i32
  }
}

</mosaic_0001>

<llo_original>
// kernel: tpu_custom_call.1
$region0: #{tpu_custom_call.1}
  #allocation0 [shape = 'u32[]', space=smem, size = 0x4, offset = 0x4, fixed_abs, tag = 'smem constant byte address 0x4 - core index']
  #allocation1 [shape = 'u32[144,128]{1,0:T(1,128)}', space=vmem, size = 0x12000, scoped, tag = 'internal scratch']
  %s0 = inlined_call_operand.hbm [shape: f32[16,128], index: 0, kind: input, shape index: {}]
  %s1 = inlined_call_operand.hbm [shape: f32[16,128], index: 1, kind: input, shape index: {}]
  %s2 = inlined_call_operand.hbm [shape: f32[16,128], index: 2, kind: input, shape index: {}]
  %s3 = inlined_call_operand.hbm [shape: f32[8,128], index: 3, kind: output, shape index: {}]
  %s4 = sld [smem:[#allocation0]]
  $region38: #{tpu_custom_call.1} parent=0
    _
  %s6 = ssub.s32 1, %s4
  %s7 = scalar_select 0, %s6, %s4
  $region1: #{tpu_custom_call.1} parent=0
    #allocation2 [shape = 'u8[8192]{0}', space=vmem, size = 0x2000, scoped, tag = 'input window, operand 0, single buffered']
    #allocation3 [shape = 's32[1]{0}', space=sflag, size = 0x4, scoped, tag = 'scoped memory for tpu_custom_call.1']
    #allocation4 [shape = 's32[1]{0}', space=sflag, size = 0x4, scoped, tag = 'scoped memory for tpu_custom_call.1']
    #allocation5 [shape = 'u8[8192]{0}', space=vmem, size = 0x2000, scoped, tag = 'input window, operand 1, single buffered']
    #allocation6 [shape = 's32[1]{0}', space=sflag, size = 0x4, scoped, tag = 'scoped memory for tpu_custom_call.1']
    #allocation7 [shape = 'u8[8192]{0}', space=vmem, size = 0x2000, scoped, tag = 'input window, operand 2, single buffered']
    #allocation8 [shape = 'u8[4096]{0}', space=vmem, size = 0x1000, scoped, tag = 'output window, operand 0, single buffered']
    %8 = vsyncpa [#allocation3], 0
    %9 = vsyncpa [#allocation6], 0
    %10 = vsyncpa [#allocation4], 0
    // Predicated region
    $region2: #{tpu_custom_call.1} parent=1 // pred_check
      _
    $region3: #{tpu_custom_call.1} parent=1 // pred_check_branch
      %12 = sbr.rel (0) target = $region5
    $region4: #{tpu_custom_call.1} parent=1 // pred_region
      %s13 = sadd.s32 0, 0
      %p14 = scmp.lt.s32.totalorder %s13, 0
      %s15 = scalar_select %p14, %s13, 0
      %s16 = smul.u32 2, %s15
      %s18 = ssub.s32 256, 256
      %19 = vsyncadd [#allocation3], %s18
      %s20 = smul.addr %s16, 128
      %s21 = scalar_lea.hbm %s0, %s20
      %s22 = sshll.u32 [#allocation2], 4
      %s23 = int_to_ptr.vmem [resolvable:$true] %s22
      %28 = dma.hbm_to_vmem [thread:$0]  %s21, 256, %s23, [#allocation3], 128, 128, 8
    $region5: #{tpu_custom_call.1} parent=1 // pred_fallthru
      _
    // Predicated region
    $region6: #{tpu_custom_call.1} parent=1 // pred_check
      _
    $region7: #{tpu_custom_call.1} parent=1 // pred_check_branch
      %30 = sbr.rel (0) target = $region9
    $region8: #{tpu_custom_call.1} parent=1 // pred_region
      %s31 = sadd.s32 0, 0
      %p32 = scmp.lt.s32.totalorder %s31, 0
      %s33 = scalar_select %p32, %s31, 0
      %s34 = smul.u32 2, %s33
      %s36 = ssub.s32 256, 256
      %37 = vsyncadd [#allocation6], %s36
      %s38 = smul.addr %s34, 128
      %s39 = scalar_lea.hbm %s1, %s38
      %s40 = sshll.u32 [#allocation5], 4
      %s41 = int_to_ptr.vmem [resolvable:$true] %s40
      %46 = dma.hbm_to_vmem [thread:$0]  %s39, 256, %s41, [#allocation6], 128, 128, 8
    $region9: #{tpu_custom_call.1} parent=1 // pred_fallthru
      _
    // Predicated region
    $region10: #{tpu_custom_call.1} parent=1 // pred_check
      _
    $region11: #{tpu_custom_call.1} parent=1 // pred_check_branch
      %48 = sbr.rel (0) target = $region13
    $region12: #{tpu_custom_call.1} parent=1 // pred_region
      %s49 = sadd.s32 0, 0
      %p50 = scmp.lt.s32.totalorder %s49, 0
      %s51 = scalar_select %p50, %s49, 0
      %s52 = smul.u32 2, %s51
      %s54 = ssub.s32 256, 256
      %55 = vsyncadd [#allocation6], %s54
      %s56 = smul.addr %s52, 128
      %s57 = scalar_lea.hbm %s2, %s56
      %s58 = sshll.u32 [#allocation7], 4
      %s59 = int_to_ptr.vmem [resolvable:$true] %s58
      %64 = dma.hbm_to_vmem [thread:$0]  %s57, 256, %s59, [#allocation6], 128, 128, 8
    $region13: #{tpu_custom_call.1} parent=1 // pred_fallthru
      _
    // Predicated region
    $region14: #{tpu_custom_call.1} parent=1 // pred_check
      _
    $region15: #{tpu_custom_call.1} parent=1 // pred_check_branch
      %66 = sbr.rel (0) target = $region17
    $region16: #{tpu_custom_call.1} parent=1 // pred_region
      %67 = dma.done [#allocation3], 256
    $region17: #{tpu_custom_call.1} parent=1 // pred_fallthru
      _
    // Predicated region
    $region18: #{tpu_custom_call.1} parent=1 // pred_check
      _
    $region19: #{tpu_custom_call.1} parent=1 // pred_check_branch
      %69 = sbr.rel (0) target = $region21
    $region20: #{tpu_custom_call.1} parent=1 // pred_region
      %70 = dma.done [#allocation6], 256
    $region21: #{tpu_custom_call.1} parent=1 // pred_fallthru
      _
    // Predicated region
    $region22: #{tpu_custom_call.1} parent=1 // pred_check
      _
    $region23: #{tpu_custom_call.1} parent=1 // pred_check_branch
      %72 = sbr.rel (0) target = $region25
    $region24: #{tpu_custom_call.1} parent=1 // pred_region
      %73 = dma.done [#allocation6], 256
    $region25: #{tpu_custom_call.1} parent=1 // pred_fallthru
      _
    %s74 = sadd.s32 0, 0
    %p75 = scmp.lt.s32.totalorder %s74, 0
    %s76 = scalar_select %p75, %s74, 0
    %s77 = smul.u32 2, %s76
    %s78 = sadd.s32 0, 0
    %p79 = scmp.lt.s32.totalorder %s78, 0
    %s80 = scalar_select %p79, %s78, 0
    %s81 = smul.u32 2, %s80
    %s82 = sadd.s32 0, 0
    %p83 = scmp.lt.s32.totalorder %s82, 0
    %s84 = scalar_select %p83, %s82, 0
    %s85 = smul.u32 2, %s84
    %p86 = scmp.eq.s32.totalorder 0, 0
    // Predicated region
    $region26: #{tpu_custom_call.1} parent=1 // pred_check
      %p87 = pneg %p86
    $region27: #{tpu_custom_call.1} parent=1 // pred_check_branch
      %89 = sbr.rel (%p87) target = $region29
    $region28: #{tpu_custom_call.1} parent=1 // pred_region
      %90 = vst [vmem:[#allocation8] sm:$0xff] 0.0
    $region29: #{tpu_custom_call.1} parent=1 // pred_fallthru
      _
    %v91 = vld [vmem:[#allocation2] sm:$0xff]
    %v92 = vld [vmem:[#allocation2 + $0x8] sm:$0xff]
    %v93 = vld [vmem:[#allocation5] sm:$0xff]
    %v94 = vld [vmem:[#allocation5 + $0x8] sm:$0xff]
    %v95 = vld [vmem:[#allocation7] sm:$0xff]
    %v96 = vld [vmem:[#allocation7 + $0x8] sm:$0xff]
    %v97 = vsub.f32 %v91, %v93
    %v98 = vsub.f32 %v92, %v94
    %v99 = vmul.f32 %v95, %v97
    %v100 = vmul.f32 %v96, %v98
    %v101 = vand.u32 2147483647, %v99
    %v102 = vand.u32 2147483647, %v100
    %vm103 = vcmp.lt.f32.partialorder %v101, 10.0
    %vm104 = vcmp.lt.f32.partialorder %v102, 10.0
    %v105 = vmul.f32 %v101, 0.5
    %v106 = vmul.f32 %v102, 0.5
    %v107 = vadd.f32 %v105, 1.0
    %v108 = vadd.f32 %v106, 1.0
    %v109 = vlog2.pop %v107
    %v110 = vmul.f32 %v109, 0.6931472
    %v111 = vlog2.pop %v108
    %v112 = vmul.f32 %v111, 0.6931472
    %v113 = vmul.f32 %v110, 10.0
    %v114 = vmul.f32 %v112, 10.0
    %v115 = vsub.f32 %v101, -7.917595
    %v116 = vsub.f32 %v102, -7.917595
    %v117 = vsel %vm103, %v113, %v115
    %v118 = vsel %vm104, %v114, %v116
    %v119 = vld [vmem:[#allocation8] sm:$0xff]
    %v120 = vadd.f32 %v117, %v118
    %v121 = vadd.f32 %v119, %v120
    %122 = vst [vmem:[#allocation8] sm:$0xff] %v121
    // Predicated region
    $region30: #{tpu_custom_call.1} parent=1 // pred_check
      _
    $region31: #{tpu_custom_call.1} parent=1 // pred_check_branch
      %124 = sbr.rel (0) target = $region33
    $region32: #{tpu_custom_call.1} parent=1 // pred_region
      %s126 = ssub.s32 128, 128
      %127 = vsyncadd [#allocation4], %s126
      %s129 = sshll.u32 [#allocation8], 4
      %s130 = int_to_ptr.vmem [resolvable:$true] %s129
      %132 = dma.vmem_to_hbm [thread:$0]  %s130, 128, %s3, [#allocation4]
    $region33: #{tpu_custom_call.1} parent=1 // pred_fallthru
      _
    // Predicated region
    $region34: #{tpu_custom_call.1} parent=1 // pred_check
      _
    $region35: #{tpu_custom_call.1} parent=1 // pred_check_branch
      %134 = sbr.rel (0) target = $region37
    $region36: #{tpu_custom_call.1} parent=1 // pred_region
      %135 = dma.done [#allocation4], 128
    $region37: #{tpu_custom_call.1} parent=1 // pred_fallthru
      _
    %136 = vsyncpa [#allocation3], 1
    %137 = vsyncpa [#allocation6], 1
    %138 = vsyncpa [#allocation4], 1

</llo_original>
